<compile_context>
chip_gen: v7x
topology: tpu7x:2x2x1
jax: 0.10.0
libtpu: 0.0.40
codegen_flags: <defaults>
</compile_context>

<pallas_src>
import numpy as np

import jax
import jax.numpy as jnp
from jax.experimental import pallas as pl
from jax.experimental.pallas import tpu as pltpu


# ---------------------------------------------------------------------------
# Init-time constant builders (pure numpy; everything is static).
# ---------------------------------------------------------------------------
def _round_up(x, m):
    return -(-x // m) * m


def _conv_band_cat(w_oihw, w_in):
    """(Cin*W, 3*Cout*W): per-kh banded lane-mixing matrices, concatenated.

    With activations laid out as lanes = c*W + x, tap kh of a 3x3 'same' conv
    (width zero-padding folded in) is  act @ M[kh];  the three taps are stored
    side by side so the conv needs a single matmul.
    """
    wt = np.asarray(w_oihw, np.float32)
    cout, cin, kh_, kw_ = wt.shape
    m = np.zeros((kh_, cin * w_in, cout * w_in), np.float32)
    for kh in range(kh_):
        for kw in range(kw_):
            for x_out in range(w_in):
                x_in = x_out + kw - 1
                if not 0 <= x_in < w_in:
                    continue
                for c in range(cin):
                    m[kh, c * w_in + x_in, x_out::w_in] = wt[:, c, kh, kw]
    return np.concatenate([m[k] for k in range(kh_)], axis=1)


def _conv_row_masks(n, h):
    """0/1 vectors zeroing the first / last row of every image (height pad)."""
    top = np.ones((n * h,), np.float32)
    bot = np.ones((n * h,), np.float32)
    for b in range(n):
        top[b * h] = 0.0
        bot[b * h + h - 1] = 0.0
    return top, bot


def _pool_row_sel(n, h_in):
    """(n*h_in//2, n*h_in): picks even image rows (row b*h_in+2y -> b*ho+y)."""
    ho = h_in // 2
    r = np.zeros((n * ho, n * h_in), np.float32)
    for b in range(n):
        for y in range(ho):
            r[b * ho + y, b * h_in + 2 * y] = 1.0
    return r


def _pool_col_sel(c, w_in):
    """(c*w_in, c*(w_in//2)): compacts even lanes c*w_in+2x -> c*(w_in//2)+x."""
    wo = w_in // 2
    g = np.zeros((c * w_in, c * wo), np.float32)
    for ch in range(c):
        for x in range(wo):
            g[ch * w_in + 2 * x, ch * wo + x] = 1.0
    return g


def _fc1_rep(w_fc1, c, h, w):
    """(c*w, h*fc): column block y = fc1 weights for image row y.

    Folds the PyTorch NCHW flatten (input index c*h*w + y*w + x) into the
    weights so no runtime transpose/flatten is needed.
    """
    wt = np.asarray(w_fc1, np.float32)        # (fc, c*h*w), PyTorch (out, in)
    fc = wt.shape[0]
    rep = np.zeros((c * w, h * fc), np.float32)
    for y in range(h):
        for ch in range(c):
            for x in range(w):
                rep[ch * w + x, y * fc:(y + 1) * fc] = wt[:, ch * h * w + y * w + x]
    return rep


def _fc1_mask(n, h, fc):
    """(n*h, h*fc) block-diagonal mask: row r keeps only weight block y==r."""
    m = np.zeros((n * h, h * fc), np.float32)
    for b in range(n):
        for r in range(h):
            m[b * h + r, r * fc:(r + 1) * fc] = 1.0
    return m


def _fc1_col_collapse(h, fc):
    """(h*fc, fc): stacked identities; sums the h column blocks."""
    k = np.zeros((h * fc, fc), np.float32)
    for y in range(h):
        k[y * fc:(y + 1) * fc, :] = np.eye(fc, dtype=np.float32)
    return k


def _fc1_row_reduce(n, h):
    """(n, n*h): sums the h rows of each sample."""
    r = np.zeros((n, n * h), np.float32)
    for b in range(n):
        r[b, b * h:(b + 1) * h] = 1.0
    return r


def _pack_rows(sections, lanes):
    """Pack named 2-D arrays row-wise into one (R, lanes) slab.

    Each section starts on a 16-row boundary (bf16 sublane tile); returns
    (slab_f32, {name: (row0, rows, cols)}).
    """
    meta, row, arrs = {}, 0, []
    for name, a in sections:
        a = np.asarray(a, np.float32)
        if a.ndim == 1:
            a = a[None, :]
        assert a.shape[1] <= lanes, (name, a.shape, lanes)
        meta[name] = (row, a.shape[0], a.shape[1])
        arrs.append((name, a))
        row += _round_up(a.shape[0], 16)
    slab = np.zeros((_round_up(row, 16), lanes), np.float32)
    for name, a in arrs:
        r0, r, c = meta[name]
        slab[r0:r0 + r, :c] = a
    return slab, meta


# ---------------------------------------------------------------------------
# Fused forward-pass builder (constants + single Pallas kernel).
# ---------------------------------------------------------------------------
def build_net_forward(params, *, batch, in_channels, height, width):
    """Returns a jitted forward(x_nchw) running the whole Net as ONE Pallas call."""
    c1w = np.asarray(params["conv1_w"], np.float32)
    c1b = np.asarray(params["conv1_b"], np.float32)
    c2w = np.asarray(params["conv2_w"], np.float32)
    c2b = np.asarray(params["conv2_b"], np.float32)
    f1w = np.asarray(params["fc1_w"], np.float32)
    f1b = np.asarray(params["fc1_b"], np.float32)
    f2w = np.asarray(params["fc2_w"], np.float32)
    f2b = np.asarray(params["fc2_b"], np.float32)

    n, cin, h1, w1 = batch, in_channels, height, width
    c1, c2 = c1w.shape[0], c2w.shape[0]
    h2, w2, h3, w3 = h1 // 2, w1 // 2, h1 // 4, w1 // 4
    fc, ncls = f1w.shape[0], f2w.shape[0]

    # Shape guards (review correctness concern: previously silent assumptions).
    assert h1 % 4 == 0 and w1 % 4 == 0, "H and W must be divisible by 4"
    assert c1w.shape[1] == cin and c2w.shape[1] == c1
    assert f1w.shape[1] == c2 * h3 * w3 and f2w.shape[1] == fc

    # ---- fused constants (pool even-column compaction folded downstream) ----
    c1_band = _conv_band_cat(c1w, w1)                               # (cin*w1, 3*c1*w1)
    c2_band = _pool_col_sel(c1, w1) @ _conv_band_cat(c2w, w2)       # (c1*w1, 3*c2*w2)
    fc1_slab = _pool_col_sel(c2, w2) @ _fc1_rep(f1w, c2, h3, w3)    # (c2*w2, h3*fc)

    top1, bot1 = _conv_row_masks(n, h1)
    top2, bot2 = _conv_row_masks(n, h2)

    slab_a_np, ma = _pack_rows(
        [("c1_band", c1_band), ("c2_band", c2_band)],
        lanes=_round_up(max(c1_band.shape[1], c2_band.shape[1]), 128))

    sections_b = [
        ("fc1_w", fc1_slab),
        ("fc1_mask", _fc1_mask(n, h3, fc)),
        ("fc1_col", _fc1_col_collapse(h3, fc)),
        ("fc1_red", _fc1_row_reduce(n, h3)),
        ("p1_row", _pool_row_sel(n, h1)),
        ("p2_row", _pool_row_sel(n, h2)),
        ("c1_mt", np.broadcast_to(top1[:, None], (n * h1, c1 * w1))),
        ("c1_mb", np.broadcast_to(bot1[:, None], (n * h1, c1 * w1))),
        ("c2_mt", np.broadcast_to(top2[:, None], (n * h2, c2 * w2))),
        ("c2_mb", np.broadcast_to(bot2[:, None], (n * h2, c2 * w2))),
        ("c1_b", np.repeat(c1b, w1)[None, :]),
        ("c2_b", np.repeat(c2b, w2)[None, :]),
        ("fc1_b", f1b[None, :]),
        ("fc2_w", f2w.T),
        ("fc2_b", f2b[None, :]),
    ]
    lanes_b = _round_up(max(a.shape[1] for _, a in sections_b), 128)
    slab_b_np, mb = _pack_rows(sections_b, lanes=lanes_b)

    # Constants live as bf16 (halves HBM->VMEM traffic; MXU is bf16-native).
    slab_a = jnp.asarray(slab_a_np, jnp.bfloat16)
    slab_b = jnp.asarray(slab_b_np, jnp.bfloat16)

    bf16, f32 = jnp.bfloat16, jnp.float32
    cw1, cw2 = c1 * w1, c2 * w2
    x2d_shape = (n * h1, cin * w1)

    def mm(a, b):
        return jnp.dot(a.astype(bf16), b.astype(bf16), preferred_element_type=f32)

    def kernel(x_ref, a_ref, b_ref, o_ref):
        def A(key):
            r0, r, c = ma[key]
            return a_ref[r0:r0 + r, :c]

        def B(key):
            r0, r, c = mb[key]
            return b_ref[r0:r0 + r, :c]

        def conv3x3_relu(act, band_key, bias_key, mt_key, mb_key, cw):
            """3x3 'same' conv: ONE matmul; kh taps recombined by sublane roll."""
            g = mm(act, A(band_key))                      # (rows, 3*cw) f32
            rows = g.shape[0]
            g0, g1, g2 = g[:, :cw], g[:, cw:2 * cw], g[:, 2 * cw:3 * cw]
            up = pltpu.roll(g0, 1, axis=0) * B(mt_key)         # tap kh=0 (row above)
            dn = pltpu.roll(g2, rows - 1, axis=0) * B(mb_key)  # tap kh=2 (row below)
            return jnp.maximum(up + g1 + dn + B(bias_key), 0.0)

        def maxpool2x2_rows(act, rsel_key):
            """2x2 maxpool; even-column compaction is pre-folded downstream."""
            rows, lanes = act.shape
            m = jnp.maximum(act, pltpu.roll(act, lanes - 1, axis=1))  # lane pairs
            m = jnp.maximum(m, pltpu.roll(m, rows - 1, axis=0))       # row pairs
            return mm(B(rsel_key), m)                                 # even-row decimation

        # features: conv -> relu -> pool -> conv -> relu -> pool
        act = conv3x3_relu(x_ref[...], "c1_band", "c1_b", "c1_mt", "c1_mb", cw1)
        act = maxpool2x2_rows(act, "p1_row")            # (n*h2, c1*w1)
        act = conv3x3_relu(act, "c2_band", "c2_b", "c2_mt", "c2_mb", cw2)
        act = maxpool2x2_rows(act, "p2_row")            # (n*h3, c2*w2)

        # classifier: fc1 (+ReLU).  PyTorch NCHW flatten + per-image-row weight
        # blocks are folded into fc1_w; the block-diag mask keeps row r * block r.
        p = mm(act, B("fc1_w")) * B("fc1_mask")         # (n*h3, h3*fc)
        q = mm(p, B("fc1_col"))                         # (n*h3, fc)
        y = jnp.maximum(mm(B("fc1_red"), q) + B("fc1_b"), 0.0)   # (n, fc)
        # Dropout(p=0.5) is an inference-time identity.
        o_ref[...] = (mm(y, B("fc2_w")) + B("fc2_b")).astype(o_ref.dtype)

    fused = pl.pallas_call(
        kernel,
        out_shape=jax.ShapeDtypeStruct((n, ncls), jnp.float32),
        grid=(1,),
        in_specs=[pl.BlockSpec(x2d_shape, lambda i: (0, 0)),
                  pl.BlockSpec(slab_a.shape, lambda i: (0, 0)),
                  pl.BlockSpec(slab_b.shape, lambda i: (0, 0))],
        out_specs=pl.BlockSpec((n, ncls), lambda i: (0, 0)),
        compiler_params=pltpu.CompilerParams(dimension_semantics=("arbitrary",)),
    )

    @jax.jit
    def forward(x_nchw):
        # NCHW -> channel-major 2-D layout (rows = (n, h), lanes = c*W + w).
        # Tiny (8 KiB) XLA transpose; removes the in-kernel conversion matmuls.
        x2d = jnp.transpose(x_nchw, (0, 2, 1, 3)).reshape(x2d_shape).astype(bf16)
        return fused(x2d, slab_a, slab_b)

    return forward


# ---------------------------------------------------------------------------
# Model params (PyTorch layouts) + pure-JAX reference for validation.
# ---------------------------------------------------------------------------
def init_params(key, in_channels=4, fc_in=256, fc_nodes=32, num_classes=3):
    """Deterministic synthetic weights in PyTorch layouts (OIHW / (out, in))."""
    ks = jax.random.split(key, 8)
    s = 0.1
    return {
        "conv1_w": s * jax.random.normal(ks[0], (8, in_channels, 3, 3), jnp.float32),
        "conv1_b": s * jax.random.normal(ks[1], (8,), jnp.float32),
        "conv2_w": s * jax.random.normal(ks[2], (16, 8, 3, 3), jnp.float32),
        "conv2_b": s * jax.random.normal(ks[3], (16,), jnp.float32),
        "fc1_w": s * jax.random.normal(ks[4], (fc_nodes, fc_in), jnp.float32),
        "fc1_b": s * jax.random.normal(ks[5], (fc_nodes,), jnp.float32),
        "fc2_w": s * jax.random.normal(ks[6], (num_classes, fc_nodes), jnp.float32),
        "fc2_b": s * jax.random.normal(ks[7], (num_classes,), jnp.float32),
    }


@jax.jit
def reference_forward(x_nchw, params):
    """Pure-JAX (XLA) reference of the same forward pass, for validation."""
    x = jnp.transpose(x_nchw, (0, 2, 3, 1))                    # NCHW -> NHWC

    def conv3x3_relu(x, w, b):
        n, h, ww, cin = x.shape
        xp = jnp.pad(x, ((0, 0), (1, 1), (1, 1), (0, 0)))
        cols = [xp[:, dh:dh + h, dw:dw + ww, :] for dh in range(3) for dw in range(3)]
        pat = jnp.concatenate(cols, axis=-1).reshape(n * h * ww, 9 * cin)
        wm = jnp.transpose(w, (2, 3, 1, 0)).reshape(9 * cin, -1)
        y = jnp.maximum(pat @ wm + b, 0.0)
        return y.reshape(n, h, ww, -1)

    def maxpool2x2(x):
        n, h, ww, c = x.shape
        return jnp.max(x.reshape(n, h // 2, 2, ww // 2, 2, c), axis=(2, 4))

    x = maxpool2x2(conv3x3_relu(x, params["conv1_w"], params["conv1_b"]))
    x = maxpool2x2(conv3x3_relu(x, params["conv2_w"], params["conv2_b"]))
    x = jnp.transpose(x, (0, 3, 1, 2)).reshape(x.shape[0], -1)  # PyTorch .view(N,-1)
    x = jnp.maximum(x @ params["fc1_w"].T + params["fc1_b"], 0.0)
    return x @ params["fc2_w"].T + params["fc2_b"]


if __name__ == "__main__":
    key = jax.random.PRNGKey(0)
    k_x, k_p = jax.random.split(key)

    # Small shapes: batch=2, channels=4, spatial 16x16 (NCHW, like PyTorch).
    n, cin, h, w = 2, 4, 16, 16
    x = jax.random.normal(k_x, (n, cin, h, w), jnp.float32)

    # Feature map after the two conv/pool stages: (n, 16, 4, 4) -> flatten 256.
    params = init_params(k_p, in_channels=cin, fc_in=16 * (h // 4) * (w // 4),
                         fc_nodes=32, num_classes=3)

    forward = build_net_forward(params, batch=n, in_channels=cin,
                                height=h, width=w)

    out = jax.block_until_ready(forward(x))
    assert out.shape == (n, 3) and out.dtype == jnp.float32

    ref = jax.block_until_ready(reference_forward(x, params))
    assert jnp.allclose(out, ref, rtol=5e-2, atol=5e-2), (
        "mismatch vs reference, max |diff| = "
        f"{float(jnp.max(jnp.abs(out - ref)))}")

    print("KERNEL_OK")
</pallas_src>

<mosaic_0001>
module attributes {stable_mosaic.version = 11 : i64} {
  func.func @kernel(%arg0: i32, %arg1: memref<32x64xbf16, #tpu.memory_space<vmem>>, %arg2: memref<192x384xbf16, #tpu.memory_space<vmem>>, %arg3: memref<512x128xbf16, #tpu.memory_space<vmem>>, %arg4: memref<2x3xf32, #tpu.memory_space<vmem>>) attributes {dimension_semantics = [#tpu.dimension_semantics<arbitrary>], iteration_bounds = array<i64: 1>, scalar_prefetch = 0 : i64, scratch_operands = 0 : i64, tpu.core_type = #tpu.core_type<tc>, window_params = [{pipeline_mode = #tpu.pipeline_mode<synchronous>, transform_indices = @transform_0, window_bounds = array<i64: 32, 64>}, {pipeline_mode = #tpu.pipeline_mode<synchronous>, transform_indices = @transform_1, window_bounds = array<i64: 192, 384>}, {pipeline_mode = #tpu.pipeline_mode<synchronous>, transform_indices = @transform_2, window_bounds = array<i64: 512, 128>}, {pipeline_mode = #tpu.pipeline_mode<synchronous>, transform_indices = @transform_3, window_bounds = array<i64: 2, 3>}]} {
    %c0 = arith.constant 0 : index
    %c0_0 = arith.constant 0 : index
    %0 = vector.load %arg1[%c0, %c0_0] : memref<32x64xbf16, #tpu.memory_space<vmem>>, vector<32x64xbf16>
    %c0_1 = arith.constant 0 : index
    %c0_2 = arith.constant 0 : index
    %1 = vector.load %arg2[%c0_1, %c0_2] : memref<192x384xbf16, #tpu.memory_space<vmem>>, vector<64x384xbf16>
    %cst = arith.constant dense<0.000000e+00> : vector<32x384xf32>
    %2 = tpu.matmul %0, %1, %cst {dimension_numbers = #tpu.dot_dimension_numbers<[1], [0], [0], [1], [0, 0, 1, 1], [], []>} : vector<32x64xbf16>, vector<64x384xbf16>, vector<32x384xf32> -> vector<32x384xf32>
    %3 = vector.extract_strided_slice %2 {offsets = [0, 0], sizes = [32, 128], strides = [1, 1]} : vector<32x384xf32> to vector<32x128xf32>
    %4 = vector.extract_strided_slice %2 {offsets = [0, 128], sizes = [32, 128], strides = [1, 1]} : vector<32x384xf32> to vector<32x128xf32>
    %5 = vector.extract_strided_slice %2 {offsets = [0, 256], sizes = [32, 128], strides = [1, 1]} : vector<32x384xf32> to vector<32x128xf32>
    %c1_i32 = arith.constant 1 : i32
    %6 = tpu.dynamic_rotate %3 by %c1_i32 dim 0 : vector<32x128xf32>, i32 -> vector<32x128xf32>
    %c320 = arith.constant 320 : index
    %c0_3 = arith.constant 0 : index
    %7 = vector.load %arg3[%c320, %c0_3] : memref<512x128xbf16, #tpu.memory_space<vmem>>, vector<32x128xbf16>
    %8 = arith.extf %7 : vector<32x128xbf16> to vector<32x128xf32>
    %9 = arith.mulf %6, %8 : vector<32x128xf32>
    %c31_i32 = arith.constant 31 : i32
    %10 = tpu.dynamic_rotate %5 by %c31_i32 dim 0 : vector<32x128xf32>, i32 -> vector<32x128xf32>
    %c352 = arith.constant 352 : index
    %c0_4 = arith.constant 0 : index
    %11 = vector.load %arg3[%c352, %c0_4] : memref<512x128xbf16, #tpu.memory_space<vmem>>, vector<32x128xbf16>
    %12 = arith.extf %11 : vector<32x128xbf16> to vector<32x128xf32>
    %13 = arith.mulf %10, %12 : vector<32x128xf32>
    %14 = arith.addf %9, %4 : vector<32x128xf32>
    %15 = arith.addf %14, %13 : vector<32x128xf32>
    %c416 = arith.constant 416 : index
    %c0_5 = arith.constant 0 : index
    %16 = vector.load %arg3[%c416, %c0_5] : memref<512x128xbf16, #tpu.memory_space<vmem>>, vector<1x128xbf16>
    %17 = arith.extf %16 : vector<1x128xbf16> to vector<1x128xf32>
    %18 = vector.broadcast %17 : vector<1x128xf32> to vector<32x128xf32>
    %19 = arith.addf %15, %18 : vector<32x128xf32>
    %cst_6 = arith.constant 0.000000e+00 : f32
    %20 = vector.broadcast %cst_6 : f32 to vector<32x128xf32>
    %21 = arith.maximumf %19, %20 : vector<32x128xf32>
    %c127_i32 = arith.constant 127 : i32
    %22 = tpu.dynamic_rotate %21 by %c127_i32 dim 1 : vector<32x128xf32>, i32 -> vector<32x128xf32>
    %23 = arith.maximumf %21, %22 : vector<32x128xf32>
    %c31_i32_7 = arith.constant 31 : i32
    %24 = tpu.dynamic_rotate %23 by %c31_i32_7 dim 0 : vector<32x128xf32>, i32 -> vector<32x128xf32>
    %25 = arith.maximumf %23, %24 : vector<32x128xf32>
    %c288 = arith.constant 288 : index
    %c0_8 = arith.constant 0 : index
    %26 = vector.load %arg3[%c288, %c0_8] : memref<512x128xbf16, #tpu.memory_space<vmem>>, vector<16x32xbf16>
    %27 = arith.truncf %25 : vector<32x128xf32> to vector<32x128xbf16>
    %cst_9 = arith.constant dense<0.000000e+00> : vector<16x128xf32>
    %28 = tpu.matmul %26, %27, %cst_9 {dimension_numbers = #tpu.dot_dimension_numbers<[1], [0], [0], [1], [0, 0, 1, 1], [], []>} : vector<16x32xbf16>, vector<32x128xbf16>, vector<16x128xf32> -> vector<16x128xf32>
    %c64 = arith.constant 64 : index
    %c0_10 = arith.constant 0 : index
    %29 = vector.load %arg2[%c64, %c0_10] : memref<192x384xbf16, #tpu.memory_space<vmem>>, vector<128x384xbf16>
    %30 = arith.truncf %28 : vector<16x128xf32> to vector<16x128xbf16>
    %cst_11 = arith.constant dense<0.000000e+00> : vector<16x384xf32>
    %31 = tpu.matmul %30, %29, %cst_11 {dimension_numbers = #tpu.dot_dimension_numbers<[1], [0], [0], [1], [0, 0, 1, 1], [], []>} : vector<16x128xbf16>, vector<128x384xbf16>, vector<16x384xf32> -> vector<16x384xf32>
    %32 = vector.extract_strided_slice %31 {offsets = [0, 0], sizes = [16, 128], strides = [1, 1]} : vector<16x384xf32> to vector<16x128xf32>
    %33 = vector.extract_strided_slice %31 {offsets = [0, 128], sizes = [16, 128], strides = [1, 1]} : vector<16x384xf32> to vector<16x128xf32>
    %34 = vector.extract_strided_slice %31 {offsets = [0, 256], sizes = [16, 128], strides = [1, 1]} : vector<16x384xf32> to vector<16x128xf32>
    %c1_i32_12 = arith.constant 1 : i32
    %35 = tpu.dynamic_rotate %32 by %c1_i32_12 dim 0 : vector<16x128xf32>, i32 -> vector<16x128xf32>
    %c384 = arith.constant 384 : index
    %c0_13 = arith.constant 0 : index
    %36 = vector.load %arg3[%c384, %c0_13] : memref<512x128xbf16, #tpu.memory_space<vmem>>, vector<16x128xbf16>
    %37 = arith.extf %36 : vector<16x128xbf16> to vector<16x128xf32>
    %38 = arith.mulf %35, %37 : vector<16x128xf32>
    %c15_i32 = arith.constant 15 : i32
    %39 = tpu.dynamic_rotate %34 by %c15_i32 dim 0 : vector<16x128xf32>, i32 -> vector<16x128xf32>
    %c400 = arith.constant 400 : index
    %c0_14 = arith.constant 0 : index
    %40 = vector.load %arg3[%c400, %c0_14] : memref<512x128xbf16, #tpu.memory_space<vmem>>, vector<16x128xbf16>
    %41 = arith.extf %40 : vector<16x128xbf16> to vector<16x128xf32>
    %42 = arith.mulf %39, %41 : vector<16x128xf32>
    %43 = arith.addf %38, %33 : vector<16x128xf32>
    %44 = arith.addf %43, %42 : vector<16x128xf32>
    %c432 = arith.constant 432 : index
    %c0_15 = arith.constant 0 : index
    %45 = vector.load %arg3[%c432, %c0_15] : memref<512x128xbf16, #tpu.memory_space<vmem>>, vector<1x128xbf16>
    %46 = arith.extf %45 : vector<1x128xbf16> to vector<1x128xf32>
    %47 = vector.broadcast %46 : vector<1x128xf32> to vector<16x128xf32>
    %48 = arith.addf %44, %47 : vector<16x128xf32>
    %cst_16 = arith.constant 0.000000e+00 : f32
    %49 = vector.broadcast %cst_16 : f32 to vector<16x128xf32>
    %50 = arith.maximumf %48, %49 : vector<16x128xf32>
    %c127_i32_17 = arith.constant 127 : i32
    %51 = tpu.dynamic_rotate %50 by %c127_i32_17 dim 1 : vector<16x128xf32>, i32 -> vector<16x128xf32>
    %52 = arith.maximumf %50, %51 : vector<16x128xf32>
    %c15_i32_18 = arith.constant 15 : i32
    %53 = tpu.dynamic_rotate %52 by %c15_i32_18 dim 0 : vector<16x128xf32>, i32 -> vector<16x128xf32>
    %54 = arith.maximumf %52, %53 : vector<16x128xf32>
    %c304 = arith.constant 304 : index
    %c0_19 = arith.constant 0 : index
    %55 = vector.load %arg3[%c304, %c0_19] : memref<512x128xbf16, #tpu.memory_space<vmem>>, vector<8x16xbf16>
    %56 = arith.truncf %54 : vector<16x128xf32> to vector<16x128xbf16>
    %cst_20 = arith.constant dense<0.000000e+00> : vector<8x128xf32>
    %57 = tpu.matmul %55, %56, %cst_20 {dimension_numbers = #tpu.dot_dimension_numbers<[1], [0], [0], [1], [0, 0, 1, 1], [], []>} : vector<8x16xbf16>, vector<16x128xbf16>, vector<8x128xf32> -> vector<8x128xf32>
    %c0_21 = arith.constant 0 : index
    %c0_22 = arith.constant 0 : index
    %58 = vector.load %arg3[%c0_21, %c0_22] : memref<512x128xbf16, #tpu.memory_space<vmem>>, vector<128x128xbf16>
    %59 = arith.truncf %57 : vector<8x128xf32> to vector<8x128xbf16>
    %cst_23 = arith.constant dense<0.000000e+00> : vector<8x128xf32>
    %60 = tpu.matmul %59, %58, %cst_23 {dimension_numbers = #tpu.dot_dimension_numbers<[1], [0], [0], [1], [0, 0, 1, 1], [], []>} : vector<8x128xbf16>, vector<128x128xbf16>, vector<8x128xf32> -> vector<8x128xf32>
    %c128 = arith.constant 128 : index
    %c0_24 = arith.constant 0 : index
    %61 = vector.load %arg3[%c128, %c0_24] : memref<512x128xbf16, #tpu.memory_space<vmem>>, vector<8x128xbf16>
    %62 = arith.extf %61 : vector<8x128xbf16> to vector<8x128xf32>
    %63 = arith.mulf %60, %62 : vector<8x128xf32>
    %c144 = arith.constant 144 : index
    %c0_25 = arith.constant 0 : index
    %64 = vector.load %arg3[%c144, %c0_25] : memref<512x128xbf16, #tpu.memory_space<vmem>>, vector<128x32xbf16>
    %65 = arith.truncf %63 : vector<8x128xf32> to vector<8x128xbf16>
    %cst_26 = arith.constant dense<0.000000e+00> : vector<8x32xf32>
    %66 = tpu.matmul %65, %64, %cst_26 {dimension_numbers = #tpu.dot_dimension_numbers<[1], [0], [0], [1], [0, 0, 1, 1], [], []>} : vector<8x128xbf16>, vector<128x32xbf16>, vector<8x32xf32> -> vector<8x32xf32>
    %c272 = arith.constant 272 : index
    %c0_27 = arith.constant 0 : index
    %67 = vector.load %arg3[%c272, %c0_27] : memref<512x128xbf16, #tpu.memory_space<vmem>>, vector<2x8xbf16>
    %68 = arith.truncf %66 : vector<8x32xf32> to vector<8x32xbf16>
    %cst_28 = arith.constant dense<0.000000e+00> : vector<2x32xf32>
    %69 = tpu.matmul %67, %68, %cst_28 {dimension_numbers = #tpu.dot_dimension_numbers<[1], [0], [0], [1], [0, 0, 1, 1], [], []>} : vector<2x8xbf16>, vector<8x32xbf16>, vector<2x32xf32> -> vector<2x32xf32>
    %c448 = arith.constant 448 : index
    %c0_29 = arith.constant 0 : index
    %70 = vector.load %arg3[%c448, %c0_29] : memref<512x128xbf16, #tpu.memory_space<vmem>>, vector<1x32xbf16>
    %71 = arith.extf %70 : vector<1x32xbf16> to vector<1x32xf32>
    %72 = vector.broadcast %71 : vector<1x32xf32> to vector<2x32xf32>
    %73 = arith.addf %69, %72 : vector<2x32xf32>
    %cst_30 = arith.constant 0.000000e+00 : f32
    %74 = vector.broadcast %cst_30 : f32 to vector<2x32xf32>
    %75 = arith.maximumf %73, %74 : vector<2x32xf32>
    %c464 = arith.constant 464 : index
    %c0_31 = arith.constant 0 : index
    %76 = vector.load %arg3[%c464, %c0_31] : memref<512x128xbf16, #tpu.memory_space<vmem>>, vector<32x3xbf16>
    %77 = arith.truncf %75 : vector<2x32xf32> to vector<2x32xbf16>
    %cst_32 = arith.constant dense<0.000000e+00> : vector<2x3xf32>
    %78 = tpu.matmul %77, %76, %cst_32 {dimension_numbers = #tpu.dot_dimension_numbers<[1], [0], [0], [1], [0, 0, 1, 1], [], []>} : vector<2x32xbf16>, vector<32x3xbf16>, vector<2x3xf32> -> vector<2x3xf32>
    %c496 = arith.constant 496 : index
    %c0_33 = arith.constant 0 : index
    %79 = vector.load %arg3[%c496, %c0_33] : memref<512x128xbf16, #tpu.memory_space<vmem>>, vector<1x3xbf16>
    %80 = arith.extf %79 : vector<1x3xbf16> to vector<1x3xf32>
    %81 = vector.broadcast %80 : vector<1x3xf32> to vector<2x3xf32>
    %82 = arith.addf %78, %81 : vector<2x3xf32>
    %c0_34 = arith.constant 0 : index
    %c0_35 = arith.constant 0 : index
    %83 = vector.load %arg4[%c0_34, %c0_35] : memref<2x3xf32, #tpu.memory_space<vmem>>, vector<2x3xf32>
    tpu.vector_store %arg4[%c0_34, %c0_35], %82 {strides = array<i32>} : memref<2x3xf32, #tpu.memory_space<vmem>>, vector<2x3xf32>,
    return
  }
  func.func @transform_0(%arg0: i32) -> (i32, i32) {
    %c0_i32 = arith.constant 0 : i32
    %c0_i32_0 = arith.constant 0 : i32
    %c0_i32_1 = arith.constant 0 : i32
    return %c0_i32, %c0_i32_0 : i32, i32
  }
  func.func @transform_1(%arg0: i32) -> (i32, i32) {
    %c0_i32 = arith.constant 0 : i32
    %c0_i32_0 = arith.constant 0 : i32
    %c0_i32_1 = arith.constant 0 : i32
    return %c0_i32, %c0_i32_0 : i32, i32
  }
  func.func @transform_2(%arg0: i32) -> (i32, i32) {
    %c0_i32 = arith.constant 0 : i32
    %c0_i32_0 = arith.constant 0 : i32
    %c0_i32_1 = arith.constant 0 : i32
    return %c0_i32, %c0_i32_0 : i32, i32
  }
  func.func @transform_3(%arg0: i32) -> (i32, i32) {
    %c0_i32 = arith.constant 0 : i32
    %c0_i32_0 = arith.constant 0 : i32
    %c0_i32_1 = arith.constant 0 : i32
    return %c0_i32, %c0_i32_0 : i32, i32
  }
}

</mosaic_0001>

<llo_original>
// kernel: forward.1
$region0: #{forward.1}
  #allocation0 [shape = 'u32[]', space=smem, size = 0x4, offset = 0x4, fixed_abs, tag = 'smem constant byte address 0x4 - core index']
  #allocation1 [shape = 'u32[144,128]{1,0:T(1,128)}', space=vmem, size = 0x12000, scoped, tag = 'internal scratch']
  %s0 = inlined_call_operand.vmem [shape: bf16[32,64], index: 0, kind: input, shape index: {}]
  %s1 = inlined_call_operand.vmem [shape: bf16[192,384], index: 1, kind: input, shape index: {}]
  %s2 = inlined_call_operand.vmem [shape: bf16[512,128], index: 2, kind: input, shape index: {}]
  %s3 = inlined_call_operand.hbm [shape: f32[2,3], index: 3, kind: output, shape index: {}]
  %s4 = sld [smem:[#allocation0]]
  $region22: #{forward.1} parent=0
    _
  %s6 = ssub.s32 1, %s4
  %s7 = scalar_select 0, %s6, %s4
  $region1: #{forward.1} parent=0
    #allocation2 [shape = 'u8[1024]{0}', space=vmem, size = 0x400, scoped, tag = 'output window, operand 0, single buffered']
    #allocation3 [shape = 's32[1]{0}', space=sflag, size = 0x4, scoped, tag = 'scoped memory for forward.1']
    %8 = vsyncpa [#allocation3], 0
    // Predicated region
    $region2: #{forward.1} parent=1 // pred_check
      _
    $region3: #{forward.1} parent=1 // pred_check_branch
      %10 = sbr.rel (0) target = $region5
    $region4: #{forward.1} parent=1 // pred_region
      _
    $region5: #{forward.1} parent=1 // pred_fallthru
      _
    // Predicated region
    $region6: #{forward.1} parent=1 // pred_check
      _
    $region7: #{forward.1} parent=1 // pred_check_branch
      %12 = sbr.rel (0) target = $region9
    $region8: #{forward.1} parent=1 // pred_region
      _
    $region9: #{forward.1} parent=1 // pred_fallthru
      _
    // Predicated region
    $region10: #{forward.1} parent=1 // pred_check
      _
    $region11: #{forward.1} parent=1 // pred_check_branch
      %14 = sbr.rel (0) target = $region13
    $region12: #{forward.1} parent=1 // pred_region
      _
    $region13: #{forward.1} parent=1 // pred_fallthru
      _
    %v16 = vld [vmem:[%s0] sm:$0xf]
    %v17 = vld [vmem:[%s0 + $0x4] sm:$0xf]
    %v18 = vld [vmem:[%s0 + $0x8] sm:$0xf]
    %v19 = vld [vmem:[%s0 + $0xc] sm:$0xf]
    %v20 = vld [vmem:[%s1] sm:$0xff]
    %v21 = vld [vmem:[%s1 + $0x8] sm:$0xf]
    %v22 = vld [vmem:[%s1 + $0xc] sm:$0xff]
    %v23 = vld [vmem:[%s1 + $0x14] sm:$0xf]
    %v24 = vld [vmem:[%s1 + $0x18] sm:$0xff]
    %v25 = vld [vmem:[%s1 + $0x20] sm:$0xf]
    %v26 = vld [vmem:[%s1 + $0x24] sm:$0xff]
    %v27 = vld [vmem:[%s1 + $0x2c] sm:$0xf]
    %v28 = vld [vmem:[%s1 + $0x30] sm:$0xff]
    %v29 = vld [vmem:[%s1 + $0x38] sm:$0xf]
    %v30 = vld [vmem:[%s1 + $0x3c] sm:$0xff]
    %v31 = vld [vmem:[%s1 + $0x44] sm:$0xf]
    %v32 = vld [vmem:[%s1 + $0x48] sm:$0xff]
    %v33 = vld [vmem:[%s1 + $0x50] sm:$0xf]
    %v34 = vld [vmem:[%s1 + $0x54] sm:$0xff]
    %v35 = vld [vmem:[%s1 + $0x5c] sm:$0xf]
    %v40 = vunpack.c.l.b16 %v16
    %v41 = vunpack.c.l.b16 %v17
    %v42 = vunpack.c.l.b16 %v18
    %v43 = vunpack.c.l.b16 %v19
    %v44 = vpack.c.b16 %v41, %v40
    %v45 = vpack.c.b16 %v43, %v42
    %v62 = vunpack.c.l.b16 %v20
    %v63 = vunpack.c.h.b16 %v20
    %v64 = vunpack.c.l.b16 %v21
    %v65 = vunpack.c.l.b16 %v22
    %v66 = vunpack.c.h.b16 %v22
    %v67 = vunpack.c.l.b16 %v23
    %v68 = vunpack.c.l.b16 %v24
    %v69 = vunpack.c.h.b16 %v24
    %v70 = vunpack.c.l.b16 %v25
    %v71 = vunpack.c.l.b16 %v26
    %v72 = vunpack.c.h.b16 %v26
    %v73 = vunpack.c.l.b16 %v27
    %v74 = vunpack.c.l.b16 %v28
    %v75 = vunpack.c.h.b16 %v28
    %v76 = vunpack.c.l.b16 %v29
    %v77 = vunpack.c.l.b16 %v30
    %v78 = vunpack.c.h.b16 %v30
    %v79 = vunpack.c.l.b16 %v31
    %v80 = vunpack.c.l.b16 %v32
    %v81 = vunpack.c.h.b16 %v32
    %v82 = vunpack.c.l.b16 %v33
    %v83 = vunpack.c.l.b16 %v34
    %v84 = vunpack.c.h.b16 %v34
    %v85 = vunpack.c.l.b16 %v35
    %v86 = vpack.c.b16 %v65, %v62
    %v87 = vpack.c.b16 %v66, %v63
    %v88 = vpack.c.b16 %v67, %v64
    %v89 = vpack.c.b16 %v71, %v68
    %v90 = vpack.c.b16 %v72, %v69
    %v91 = vpack.c.b16 %v73, %v70
    %v92 = vpack.c.b16 %v77, %v74
    %v93 = vpack.c.b16 %v78, %v75
    %v94 = vpack.c.b16 %v79, %v76
    %v95 = vpack.c.b16 %v83, %v80
    %v96 = vpack.c.b16 %v84, %v81
    %v97 = vpack.c.b16 %v85, %v82
    %vm110 = vcmask 523264
    %v112 = vsel %vm110, %v44, 0
    %v115 = vsel %vm110, %v45, 0
    %117 = vmatprep.subr.bf16.mxu0 %v87
    %118 = vmatpush1.bf16.msra.mxu0 %v86
    %119 = vmatprep.subr.bf16.mxu0 %v90
    %120 = vmatpush1.bf16.msra.mxu0 %v89
    %121 = vmatprep.subr.bf16.mxu0 %v93
    %122 = vmatpush1.bf16.msra.mxu0 %v92
    %123 = vmatprep.subr.bf16.mxu0 %v96
    %124 = vmatpush1.bf16.msra.mxu0 %v95
    %125 = vmatprep.subr.bf16.mxu0 0
    %126 = vmatpush1.bf16.msra.mxu0 0
    %127 = vmatprep.subr.bf16.mxu0 0
    %128 = vmatpush1.bf16.msra.mxu0 0
    %129 = vmatprep.subr.bf16.mxu0 0
    %130 = vmatpush1.bf16.msra.mxu0 0
    %131 = vmatprep.subr.bf16.mxu0 0
    %132 = vmatpush1.bf16.msra.mxu0 0
    %133 = vmatprep.subr.bf16.mxu0 0
    %134 = vmatpush1.bf16.msra.mxu0 0
    %135 = vmatprep.subr.bf16.mxu0 0
    %136 = vmatpush1.bf16.msra.mxu0 0
    %137 = vmatprep.subr.bf16.mxu0 0
    %138 = vmatpush1.bf16.msra.mxu0 0
    %139 = vmatprep.subr.bf16.mxu0 0
    %140 = vmatpush1.bf16.msra.mxu0 0
    %141 = vmatprep.subr.bf16.mxu0 0
    %142 = vmatpush1.bf16.msra.mxu0 0
    %143 = vmatprep.subr.bf16.mxu0 0
    %144 = vmatpush1.bf16.msra.mxu0 0
    %145 = vmatprep.subr.bf16.mxu0 0
    %146 = vmatpush1.bf16.msra.mxu0 0
    %147 = vmatprep.subr.bf16.mxu0 0
    %148 = vmatpush1.bf16.msra.mxu0 0
    %149 = vmatprep.mubr.bf16.mxu0 0
    %150 = vmatmul.mubr.bf16.gmra.mrb[0].mxu0 %v112
    %v151 = vpop.f32.mrb[0].mxu0
    %v152 = vadd.f32 0.0, %v151
    %v153 = vpop.f32.mrb[0].mxu0
    %v154 = vadd.f32 0.0, %v153
    %v155 = vpop.f32.mrb[0].mxu0
    %v156 = vadd.f32 0.0, %v155
    %v157 = vpop.f32.mrb[0].mxu0
    %v158 = vadd.f32 0.0, %v157
    %159 = vmatprep.mubr.bf16.mxu0 0
    %160 = vmatmul.mubr.bf16.gmra.mrb[0].mxu0 %v115
    %v161 = vpop.f32.mrb[0].mxu0
    %v162 = vadd.f32 0.0, %v161
    %v163 = vpop.f32.mrb[0].mxu0
    %v164 = vadd.f32 0.0, %v163
    %v165 = vpop.f32.mrb[0].mxu0
    %v166 = vadd.f32 0.0, %v165
    %v167 = vpop.f32.mrb[0].mxu0
    %v168 = vadd.f32 0.0, %v167
    %169 = vdwg.mxu0
    %170 = vmatprep.subr.bf16.mxu0 0
    %171 = vmatpush1.bf16.msra.mxu0 %v88
    %172 = vmatprep.subr.bf16.mxu0 0
    %173 = vmatpush1.bf16.msra.mxu0 %v91
    %174 = vmatprep.subr.bf16.mxu0 0
    %175 = vmatpush1.bf16.msra.mxu0 %v94
    %176 = vmatprep.subr.bf16.mxu0 0
    %177 = vmatpush1.bf16.msra.mxu0 %v97
    %178 = vmatprep.subr.bf16.mxu0 0
    %179 = vmatpush1.bf16.msra.mxu0 0
    %180 = vmatprep.subr.bf16.mxu0 0
    %181 = vmatpush1.bf16.msra.mxu0 0
    %182 = vmatprep.subr.bf16.mxu0 0
    %183 = vmatpush1.bf16.msra.mxu0 0
    %184 = vmatprep.subr.bf16.mxu0 0
    %185 = vmatpush1.bf16.msra.mxu0 0
    %186 = vmatprep.subr.bf16.mxu0 0
    %187 = vmatpush1.bf16.msra.mxu0 0
    %188 = vmatprep.subr.bf16.mxu0 0
    %189 = vmatpush1.bf16.msra.mxu0 0
    %190 = vmatprep.subr.bf16.mxu0 0
    %191 = vmatpush1.bf16.msra.mxu0 0
    %192 = vmatprep.subr.bf16.mxu0 0
    %193 = vmatpush1.bf16.msra.mxu0 0
    %194 = vmatprep.subr.bf16.mxu0 0
    %195 = vmatpush1.bf16.msra.mxu0 0
    %196 = vmatprep.subr.bf16.mxu0 0
    %197 = vmatpush1.bf16.msra.mxu0 0
    %198 = vmatprep.subr.bf16.mxu0 0
    %199 = vmatpush1.bf16.msra.mxu0 0
    %200 = vmatprep.subr.bf16.mxu0 0
    %201 = vmatpush1.bf16.msra.mxu0 0
    %202 = vmatprep.mubr.bf16.mxu0 0
    %203 = vmatmul.mubr.bf16.gmra.mrb[0].mxu0 %v112
    %v204 = vpop.f32.mrb[0].mxu0
    %v205 = vadd.f32 0.0, %v204
    %v206 = vpop.f32.mrb[0].mxu0
    %v207 = vpop.f32.mrb[0].mxu0
    %v208 = vadd.f32 0.0, %v207
    %v209 = vpop.f32.mrb[0].mxu0
    %210 = vmatprep.mubr.bf16.mxu0 0
    %211 = vmatmul.mubr.bf16.gmra.mrb[0].mxu0 %v115
    %v212 = vpop.f32.mrb[0].mxu0
    %v213 = vadd.f32 0.0, %v212
    %v214 = vpop.f32.mrb[0].mxu0
    %v215 = vpop.f32.mrb[0].mxu0
    %v216 = vadd.f32 0.0, %v215
    %v217 = vpop.f32.mrb[0].mxu0
    %218 = vdwg.mxu0
    %v219 = vrot.slane %v152, 7
    %v220 = vrot.slane %v156, 7
    %v221 = vrot.slane %v162, 7
    %v222 = vrot.slane %v166, 7
    %v223 = vlaneseq
    %v224 = vshrl.u32 %v223, 7
    %vm225 = vcmp.lt.s32.totalorder %v224, 1
    %v226 = vsel %vm225, %v221, %v222
    %v227 = vsel %vm225, %v220, %v221
    %v228 = vsel %vm225, %v219, %v220
    %v229 = vsel %vm225, %v222, %v219
    %v230 = vld [vmem:[%s2 + $0xa0] sm:$0xf]
    %v231 = vld [vmem:[%s2 + $0xa4] sm:$0xf]
    %v232 = vld [vmem:[%s2 + $0xa8] sm:$0xf]
    %v233 = vld [vmem:[%s2 + $0xac] sm:$0xf]
    %v234 = vunpack.c.l.bf16 %v230
    %v235 = vunpack.c.l.bf16 %v231
    %v236 = vunpack.c.l.bf16 %v232
    %v237 = vunpack.c.l.bf16 %v233
    %v238 = vmul.f32 %v229, %v234
    %v239 = vmul.f32 %v228, %v235
    %v240 = vmul.f32 %v227, %v236
    %v241 = vmul.f32 %v226, %v237
    %v242 = vrot.slane %v205, 1
    %v243 = vrot.slane %v208, 1
    %v244 = vrot.slane %v213, 1
    %v245 = vrot.slane %v216, 1
    %vm246 = vcmp.lt.s32.totalorder %v224, 7
    %v247 = vsel %vm246, %v244, %v245
    %v248 = vsel %vm246, %v243, %v244
    %v249 = vsel %vm246, %v242, %v243
    %v250 = vsel %vm246, %v245, %v242
    %v251 = vld [vmem:[%s2 + $0xb0] sm:$0xf]
    %v252 = vld [vmem:[%s2 + $0xb4] sm:$0xf]
    %v253 = vld [vmem:[%s2 + $0xb8] sm:$0xf]
    %v254 = vld [vmem:[%s2 + $0xbc] sm:$0xf]
    %v255 = vunpack.c.l.bf16 %v251
    %v256 = vunpack.c.l.bf16 %v252
    %v257 = vunpack.c.l.bf16 %v253
    %v258 = vunpack.c.l.bf16 %v254
    %v259 = vmul.f32 %v249, %v255
    %v260 = vmul.f32 %v248, %v256
    %v261 = vmul.f32 %v247, %v257
    %v262 = vmul.f32 %v250, %v258
    %v263 = vadd.f32 %v238, %v154
    %v264 = vadd.f32 %v239, %v158
    %v265 = vadd.f32 %v240, %v164
    %v266 = vadd.f32 %v241, %v168
    %v267 = vadd.f32 %v263, %v259
    %v268 = vadd.f32 %v264, %v260
    %v269 = vadd.f32 %v265, %v261
    %v270 = vadd.f32 %v266, %v262
    %v271 = vld [vmem:[%s2 + $0xd0] sm:$0x1]
    %v272 = vunpack.c.l.bf16 %v271
    %v273 = vlaneseq
    %v274 = vshrl.u32 %v273, 7
    %v275 = vsub.s32 0, %v274
    %v276 = vrot.slane %v272, %v275
    %v277 = vadd.f32 %v267, %v276
    %v278 = vadd.f32 %v268, %v276
    %v279 = vadd.f32 %v269, %v276
    %v280 = vadd.f32 %v270, %v276
    %v281 = vmax.f32 %v277, 0.0
    %v282 = vmax.f32 %v278, 0.0
    %v283 = vmax.f32 %v279, 0.0
    %v284 = vmax.f32 %v280, 0.0
    %285 = vrot.lane.b32.xlu0 %v281, 127
    %v286 = vpop.permute.xlu0 %285
    %287 = vrot.lane.b32.xlu0 %v282, 127
    %v288 = vpop.permute.xlu0 %287
    %289 = vrot.lane.b32.xlu0 %v283, 127
    %v290 = vpop.permute.xlu0 %289
    %291 = vrot.lane.b32.xlu0 %v284, 127
    %v292 = vpop.permute.xlu0 %291
    %v293 = vmax.f32 %v281, %v286
    %v294 = vmax.f32 %v282, %v288
    %v295 = vmax.f32 %v283, %v290
    %v296 = vmax.f32 %v284, %v292
    %v297 = vrot.slane %v293, 1
    %v298 = vrot.slane %v294, 1
    %v299 = vrot.slane %v295, 1
    %v300 = vrot.slane %v296, 1
    %v301 = vsel %vm246, %v299, %v300
    %v302 = vsel %vm246, %v298, %v299
    %v303 = vsel %vm246, %v297, %v298
    %v304 = vsel %vm246, %v300, %v297
    %v305 = vmax.f32 %v293, %v303
    %v306 = vmax.f32 %v294, %v302
    %v307 = vmax.f32 %v295, %v301
    %v308 = vmax.f32 %v296, %v304
    %v309 = vld [vmem:[%s2 + $0x90] sm:$0xf]
    %v310 = vld [vmem:[%s2 + $0x94] sm:$0xf]
    %v311 = vpack.c.bf16 %v306, %v305
    %v312 = vpack.c.bf16 %v308, %v307
    %v315 = vunpack.c.l.b16 %v309
    %v316 = vunpack.c.l.b16 %v310
    %v317 = vpack.c.b16 %v316, %v315
    %vm318 = vcmask 261120
    %v320 = vsel %vm318, %v317, 0
    %322 = vmatprep.subr.bf16.mxu0 0
    %323 = vmatpush1.bf16.msra.mxu0 %v311
    %324 = vmatprep.subr.bf16.mxu0 0
    %325 = vmatpush1.bf16.msra.mxu0 %v312
    %326 = vmatprep.subr.bf16.mxu0 0
    %327 = vmatpush1.bf16.msra.mxu0 0
    %328 = vmatprep.subr.bf16.mxu0 0
    %329 = vmatpush1.bf16.msra.mxu0 0
    %330 = vmatprep.subr.bf16.mxu0 0
    %331 = vmatpush1.bf16.msra.mxu0 0
    %332 = vmatprep.subr.bf16.mxu0 0
    %333 = vmatpush1.bf16.msra.mxu0 0
    %334 = vmatprep.subr.bf16.mxu0 0
    %335 = vmatpush1.bf16.msra.mxu0 0
    %336 = vmatprep.subr.bf16.mxu0 0
    %337 = vmatpush1.bf16.msra.mxu0 0
    %338 = vmatprep.subr.bf16.mxu0 0
    %339 = vmatpush1.bf16.msra.mxu0 0
    %340 = vmatprep.subr.bf16.mxu0 0
    %341 = vmatpush1.bf16.msra.mxu0 0
    %342 = vmatprep.subr.bf16.mxu0 0
    %343 = vmatpush1.bf16.msra.mxu0 0
    %344 = vmatprep.subr.bf16.mxu0 0
    %345 = vmatpush1.bf16.msra.mxu0 0
    %346 = vmatprep.subr.bf16.mxu0 0
    %347 = vmatpush1.bf16.msra.mxu0 0
    %348 = vmatprep.subr.bf16.mxu0 0
    %349 = vmatpush1.bf16.msra.mxu0 0
    %350 = vmatprep.subr.bf16.mxu0 0
    %351 = vmatpush1.bf16.msra.mxu0 0
    %352 = vmatprep.subr.bf16.mxu0 0
    %353 = vmatpush1.bf16.msra.mxu0 0
    %354 = vmatprep.mubr.bf16.mxu0 0
    %355 = vmatmul.mubr.bf16.gmra.mrb[0].mxu0 %v320
    %v356 = vpop.f32.mrb[0].mxu0
    %v357 = vadd.f32 0.0, %v356
    %v358 = vpop.f32.mrb[0].mxu0
    %v359 = vpop.f32.mrb[0].mxu0
    %v360 = vadd.f32 0.0, %v359
    %v361 = vpop.f32.mrb[0].mxu0
    %362 = vdwg.mxu0
    %v363 = vld [vmem:[%s1 + $0x60] sm:$0xff]
    %v364 = vld [vmem:[%s1 + $0x68] sm:$0xf]
    %v365 = vld [vmem:[%s1 + $0x6c] sm:$0xff]
    %v366 = vld [vmem:[%s1 + $0x74] sm:$0xf]
    %v367 = vld [vmem:[%s1 + $0x78] sm:$0xff]
    %v368 = vld [vmem:[%s1 + $0x80] sm:$0xf]
    %v369 = vld [vmem:[%s1 + $0x84] sm:$0xff]
    %v370 = vld [vmem:[%s1 + $0x8c] sm:$0xf]
    %v371 = vld [vmem:[%s1 + $0x90] sm:$0xff]
    %v372 = vld [vmem:[%s1 + $0x98] sm:$0xf]
    %v373 = vld [vmem:[%s1 + $0x9c] sm:$0xff]
    %v374 = vld [vmem:[%s1 + $0xa4] sm:$0xf]
    %v375 = vld [vmem:[%s1 + $0xa8] sm:$0xff]
    %v376 = vld [vmem:[%s1 + $0xb0] sm:$0xf]
    %v377 = vld [vmem:[%s1 + $0xb4] sm:$0xff]
    %v378 = vld [vmem:[%s1 + $0xbc] sm:$0xf]
    %v379 = vld [vmem:[%s1 + $0xc0] sm:$0xff]
    %v380 = vld [vmem:[%s1 + $0xc8] sm:$0xf]
    %v381 = vld [vmem:[%s1 + $0xcc] sm:$0xff]
    %v382 = vld [vmem:[%s1 + $0xd4] sm:$0xf]
    %v383 = vld [vmem:[%s1 + $0xd8] sm:$0xff]
    %v384 = vld [vmem:[%s1 + $0xe0] sm:$0xf]
    %v385 = vld [vmem:[%s1 + $0xe4] sm:$0xff]
    %v386 = vld [vmem:[%s1 + $0xec] sm:$0xf]
    %v387 = vld [vmem:[%s1 + $0xf0] sm:$0xff]
    %v388 = vld [vmem:[%s1 + $0xf8] sm:$0xf]
    %v389 = vld [vmem:[%s1 + $0xfc] sm:$0xff]
    %v390 = vld [vmem:[%s1 + $0x104] sm:$0xf]
    %v391 = vld [vmem:[%s1 + $0x108] sm:$0xff]
    %v392 = vld [vmem:[%s1 + $0x110] sm:$0xf]
    %v393 = vld [vmem:[%s1 + $0x114] sm:$0xff]
    %v394 = vld [vmem:[%s1 + $0x11c] sm:$0xf]
    %v395 = vpack.c.bf16 %v360, %v357
    %v428 = vunpack.c.l.b16 %v363
    %v429 = vunpack.c.h.b16 %v363
    %v430 = vunpack.c.l.b16 %v364
    %v431 = vunpack.c.l.b16 %v365
    %v432 = vunpack.c.h.b16 %v365
    %v433 = vunpack.c.l.b16 %v366
    %v434 = vunpack.c.l.b16 %v367
    %v435 = vunpack.c.h.b16 %v367
    %v436 = vunpack.c.l.b16 %v368
    %v437 = vunpack.c.l.b16 %v369
    %v438 = vunpack.c.h.b16 %v369
    %v439 = vunpack.c.l.b16 %v370
    %v440 = vunpack.c.l.b16 %v371
    %v441 = vunpack.c.h.b16 %v371
    %v442 = vunpack.c.l.b16 %v372
    %v443 = vunpack.c.l.b16 %v373
    %v444 = vunpack.c.h.b16 %v373
    %v445 = vunpack.c.l.b16 %v374
    %v446 = vunpack.c.l.b16 %v375
    %v447 = vunpack.c.h.b16 %v375
    %v448 = vunpack.c.l.b16 %v376
    %v449 = vunpack.c.l.b16 %v377
    %v450 = vunpack.c.h.b16 %v377
    %v451 = vunpack.c.l.b16 %v378
    %v452 = vunpack.c.l.b16 %v379
    %v453 = vunpack.c.h.b16 %v379
    %v454 = vunpack.c.l.b16 %v380
    %v455 = vunpack.c.l.b16 %v381
    %v456 = vunpack.c.h.b16 %v381
    %v457 = vunpack.c.l.b16 %v382
    %v458 = vunpack.c.l.b16 %v383
    %v459 = vunpack.c.h.b16 %v383
    %v460 = vunpack.c.l.b16 %v384
    %v461 = vunpack.c.l.b16 %v385
    %v462 = vunpack.c.h.b16 %v385
    %v463 = vunpack.c.l.b16 %v386
    %v464 = vunpack.c.l.b16 %v387
    %v465 = vunpack.c.h.b16 %v387
    %v466 = vunpack.c.l.b16 %v388
    %v467 = vunpack.c.l.b16 %v389
    %v468 = vunpack.c.h.b16 %v389
    %v469 = vunpack.c.l.b16 %v390
    %v470 = vunpack.c.l.b16 %v391
    %v471 = vunpack.c.h.b16 %v391
    %v472 = vunpack.c.l.b16 %v392
    %v473 = vunpack.c.l.b16 %v393
    %v474 = vunpack.c.h.b16 %v393
    %v475 = vunpack.c.l.b16 %v394
    %v476 = vpack.c.b16 %v431, %v428
    %v477 = vpack.c.b16 %v432, %v429
    %v478 = vpack.c.b16 %v433, %v430
    %v479 = vpack.c.b16 %v437, %v434
    %v480 = vpack.c.b16 %v438, %v435
    %v481 = vpack.c.b16 %v439, %v436
    %v482 = vpack.c.b16 %v443, %v440
    %v483 = vpack.c.b16 %v444, %v441
    %v484 = vpack.c.b16 %v445, %v442
    %v485 = vpack.c.b16 %v449, %v446
    %v486 = vpack.c.b16 %v450, %v447
    %v487 = vpack.c.b16 %v451, %v448
    %v488 = vpack.c.b16 %v455, %v452
    %v489 = vpack.c.b16 %v456, %v453
    %v490 = vpack.c.b16 %v457, %v454
    %v491 = vpack.c.b16 %v461, %v458
    %v492 = vpack.c.b16 %v462, %v459
    %v493 = vpack.c.b16 %v463, %v460
    %v494 = vpack.c.b16 %v467, %v464
    %v495 = vpack.c.b16 %v468, %v465
    %v496 = vpack.c.b16 %v469, %v466
    %v497 = vpack.c.b16 %v473, %v470
    %v498 = vpack.c.b16 %v474, %v471
    %v499 = vpack.c.b16 %v475, %v472
    %524 = vmatprep.subr.bf16.mxu0 %v477
    %525 = vmatpush1.bf16.msra.mxu0 %v476
    %526 = vmatprep.subr.bf16.mxu0 %v480
    %527 = vmatpush1.bf16.msra.mxu0 %v479
    %528 = vmatprep.subr.bf16.mxu0 %v483
    %529 = vmatpush1.bf16.msra.mxu0 %v482
    %530 = vmatprep.subr.bf16.mxu0 %v486
    %531 = vmatpush1.bf16.msra.mxu0 %v485
    %532 = vmatprep.subr.bf16.mxu0 %v489
    %533 = vmatpush1.bf16.msra.mxu0 %v488
    %534 = vmatprep.subr.bf16.mxu0 %v492
    %535 = vmatpush1.bf16.msra.mxu0 %v491
    %536 = vmatprep.subr.bf16.mxu0 %v495
    %537 = vmatpush1.bf16.msra.mxu0 %v494
    %538 = vmatprep.subr.bf16.mxu0 %v498
    %539 = vmatpush1.bf16.msra.mxu0 %v497
    %540 = vmatprep.subr.bf16.mxu0 0
    %541 = vmatpush1.bf16.msra.mxu0 0
    %542 = vmatprep.subr.bf16.mxu0 0
    %543 = vmatpush1.bf16.msra.mxu0 0
    %544 = vmatprep.subr.bf16.mxu0 0
    %545 = vmatpush1.bf16.msra.mxu0 0
    %546 = vmatprep.subr.bf16.mxu0 0
    %547 = vmatpush1.bf16.msra.mxu0 0
    %548 = vmatprep.subr.bf16.mxu0 0
    %549 = vmatpush1.bf16.msra.mxu0 0
    %550 = vmatprep.subr.bf16.mxu0 0
    %551 = vmatpush1.bf16.msra.mxu0 0
    %552 = vmatprep.subr.bf16.mxu0 0
    %553 = vmatpush1.bf16.msra.mxu0 0
    %554 = vmatprep.subr.bf16.mxu0 0
    %555 = vmatpush1.bf16.msra.mxu0 0
    %556 = vmatprep.mubr.bf16.mxu0 0
    %557 = vmatmul.mubr.bf16.gmra.mrb[0].mxu0 %v395
    %v558 = vpop.f32.mrb[0].mxu0
    %v559 = vadd.f32 0.0, %v558
    %v560 = vpop.f32.mrb[0].mxu0
    %v561 = vadd.f32 0.0, %v560
    %v562 = vpop.f32.mrb[0].mxu0
    %v563 = vadd.f32 0.0, %v562
    %v564 = vpop.f32.mrb[0].mxu0
    %v565 = vadd.f32 0.0, %v564
    %566 = vdwg.mxu0
    %567 = vmatprep.subr.bf16.mxu0 0
    %568 = vmatpush1.bf16.msra.mxu0 %v478
    %569 = vmatprep.subr.bf16.mxu0 0
    %570 = vmatpush1.bf16.msra.mxu0 %v481
    %571 = vmatprep.subr.bf16.mxu0 0
    %572 = vmatpush1.bf16.msra.mxu0 %v484
    %573 = vmatprep.subr.bf16.mxu0 0
    %574 = vmatpush1.bf16.msra.mxu0 %v487
    %575 = vmatprep.subr.bf16.mxu0 0
    %576 = vmatpush1.bf16.msra.mxu0 %v490
    %577 = vmatprep.subr.bf16.mxu0 0
    %578 = vmatpush1.bf16.msra.mxu0 %v493
    %579 = vmatprep.subr.bf16.mxu0 0
    %580 = vmatpush1.bf16.msra.mxu0 %v496
    %581 = vmatprep.subr.bf16.mxu0 0
    %582 = vmatpush1.bf16.msra.mxu0 %v499
    %583 = vmatprep.subr.bf16.mxu0 0
    %584 = vmatpush1.bf16.msra.mxu0 0
    %585 = vmatprep.subr.bf16.mxu0 0
    %586 = vmatpush1.bf16.msra.mxu0 0
    %587 = vmatprep.subr.bf16.mxu0 0
    %588 = vmatpush1.bf16.msra.mxu0 0
    %589 = vmatprep.subr.bf16.mxu0 0
    %590 = vmatpush1.bf16.msra.mxu0 0
    %591 = vmatprep.subr.bf16.mxu0 0
    %592 = vmatpush1.bf16.msra.mxu0 0
    %593 = vmatprep.subr.bf16.mxu0 0
    %594 = vmatpush1.bf16.msra.mxu0 0
    %595 = vmatprep.subr.bf16.mxu0 0
    %596 = vmatpush1.bf16.msra.mxu0 0
    %597 = vmatprep.subr.bf16.mxu0 0
    %598 = vmatpush1.bf16.msra.mxu0 0
    %599 = vmatprep.mubr.bf16.mxu0 0
    %600 = vmatmul.mubr.bf16.gmra.mrb[0].mxu0 %v395
    %v601 = vpop.f32.mrb[0].mxu0
    %v602 = vadd.f32 0.0, %v601
    %v603 = vpop.f32.mrb[0].mxu0
    %v604 = vpop.f32.mrb[0].mxu0
    %v605 = vadd.f32 0.0, %v604
    %v606 = vpop.f32.mrb[0].mxu0
    %607 = vdwg.mxu0
    %v608 = vrot.slane %v559, 7
    %v609 = vrot.slane %v563, 7
    %v610 = vsel %vm225, %v608, %v609
    %v611 = vsel %vm225, %v609, %v608
    %v612 = vld [vmem:[%s2 + $0xc0] sm:$0xf]
    %v613 = vld [vmem:[%s2 + $0xc4] sm:$0xf]
    %v614 = vunpack.c.l.bf16 %v612
    %v615 = vunpack.c.l.bf16 %v613
    %v616 = vmul.f32 %v611, %v614
    %v617 = vmul.f32 %v610, %v615
    %v618 = vrot.slane %v602, 1
    %v619 = vrot.slane %v605, 1
    %v620 = vsel %vm246, %v618, %v619
    %v621 = vsel %vm246, %v619, %v618
    %v622 = vld [vmem:[%s2 + $0xc8] sm:$0xf]
    %v623 = vld [vmem:[%s2 + $0xcc] sm:$0xf]
    %v624 = vunpack.c.l.bf16 %v622
    %v625 = vunpack.c.l.bf16 %v623
    %v626 = vmul.f32 %v620, %v624
    %v627 = vmul.f32 %v621, %v625
    %v628 = vadd.f32 %v616, %v561
    %v629 = vadd.f32 %v617, %v565
    %v630 = vadd.f32 %v628, %v626
    %v631 = vadd.f32 %v629, %v627
    %v632 = vld [vmem:[%s2 + $0xd8] sm:$0x1]
    %v633 = vunpack.c.l.bf16 %v632
    %v634 = vlaneseq
    %v635 = vshrl.u32 %v634, 7
    %v636 = vsub.s32 0, %v635
    %v637 = vrot.slane %v633, %v636
    %v638 = vadd.f32 %v630, %v637
    %v639 = vadd.f32 %v631, %v637
    %v640 = vmax.f32 %v638, 0.0
    %v641 = vmax.f32 %v639, 0.0
    %642 = vrot.lane.b32.xlu0 %v640, 127
    %v643 = vpop.permute.xlu0 %642
    %644 = vrot.lane.b32.xlu0 %v641, 127
    %v645 = vpop.permute.xlu0 %644
    %v646 = vmax.f32 %v640, %v643
    %v647 = vmax.f32 %v641, %v645
    %v648 = vrot.slane %v646, 1
    %v649 = vrot.slane %v647, 1
    %v650 = vsel %vm246, %v648, %v649
    %v651 = vsel %vm246, %v649, %v648
    %v652 = vmax.f32 %v646, %v650
    %v653 = vmax.f32 %v647, %v651
    %v654 = vld [vmem:[%s2 + $0x98] sm:$0xf]
    %v655 = vpack.c.bf16 %v653, %v652
    %vm656 = vcmask 130048
    %v658 = vsel %vm656, %v654, 0
    %660 = vmatprep.subr.bf16.mxu0 0
    %661 = vmatpush1.bf16.msra.mxu0 %v655
    %662 = vmatprep.subr.bf16.mxu0 0
    %663 = vmatpush1.bf16.msra.mxu0 0
    %664 = vmatprep.subr.bf16.mxu0 0
    %665 = vmatpush1.bf16.msra.mxu0 0
    %666 = vmatprep.subr.bf16.mxu0 0
    %667 = vmatpush1.bf16.msra.mxu0 0
    %668 = vmatprep.subr.bf16.mxu0 0
    %669 = vmatpush1.bf16.msra.mxu0 0
    %670 = vmatprep.subr.bf16.mxu0 0
    %671 = vmatpush1.bf16.msra.mxu0 0
    %672 = vmatprep.subr.bf16.mxu0 0
    %673 = vmatpush1.bf16.msra.mxu0 0
    %674 = vmatprep.subr.bf16.mxu0 0
    %675 = vmatpush1.bf16.msra.mxu0 0
    %676 = vmatprep.subr.bf16.mxu0 0
    %677 = vmatpush1.bf16.msra.mxu0 0
    %678 = vmatprep.subr.bf16.mxu0 0
    %679 = vmatpush1.bf16.msra.mxu0 0
    %680 = vmatprep.subr.bf16.mxu0 0
    %681 = vmatpush1.bf16.msra.mxu0 0
    %682 = vmatprep.subr.bf16.mxu0 0
    %683 = vmatpush1.bf16.msra.mxu0 0
    %684 = vmatprep.subr.bf16.mxu0 0
    %685 = vmatpush1.bf16.msra.mxu0 0
    %686 = vmatprep.subr.bf16.mxu0 0
    %687 = vmatpush1.bf16.msra.mxu0 0
    %688 = vmatprep.subr.bf16.mxu0 0
    %689 = vmatpush1.bf16.msra.mxu0 0
    %690 = vmatprep.subr.bf16.mxu0 0
    %691 = vmatpush1.bf16.msra.mxu0 0
    %692 = vmatprep.mubr.bf16.mxu0 0
    %693 = vmatmul.mubr.bf16.gmra.mrb[0].mxu0 %v658
    %v694 = vpop.f32.mrb[0].mxu0
    %v695 = vadd.f32 0.0, %v694
    %v696 = vpop.f32.mrb[0].mxu0
    %v697 = vpop.f32.mrb[0].mxu0
    %v698 = vpop.f32.mrb[0].mxu0
    %699 = vdwg.mxu0
    %v700 = vld [vmem:[%s2] sm:$0xf]
    %v701 = vld [vmem:[%s2 + $0x4] sm:$0xf]
    %v702 = vld [vmem:[%s2 + $0x8] sm:$0xf]
    %v703 = vld [vmem:[%s2 + $0xc] sm:$0xf]
    %v704 = vld [vmem:[%s2 + $0x10] sm:$0xf]
    %v705 = vld [vmem:[%s2 + $0x14] sm:$0xf]
    %v706 = vld [vmem:[%s2 + $0x18] sm:$0xf]
    %v707 = vld [vmem:[%s2 + $0x1c] sm:$0xf]
    %v708 = vld [vmem:[%s2 + $0x20] sm:$0xf]
    %v709 = vld [vmem:[%s2 + $0x24] sm:$0xf]
    %v710 = vld [vmem:[%s2 + $0x28] sm:$0xf]
    %v711 = vld [vmem:[%s2 + $0x2c] sm:$0xf]
    %v712 = vld [vmem:[%s2 + $0x30] sm:$0xf]
    %v713 = vld [vmem:[%s2 + $0x34] sm:$0xf]
    %v714 = vld [vmem:[%s2 + $0x38] sm:$0xf]
    %v715 = vld [vmem:[%s2 + $0x3c] sm:$0xf]
    %v716 = vpack.c.bf16 %v695, %v695
    %v733 = vunpack.c.l.b16 %v700
    %v734 = vunpack.c.l.b16 %v701
    %v735 = vunpack.c.l.b16 %v702
    %v736 = vunpack.c.l.b16 %v703
    %v737 = vunpack.c.l.b16 %v704
    %v738 = vunpack.c.l.b16 %v705
    %v739 = vunpack.c.l.b16 %v706
    %v740 = vunpack.c.l.b16 %v707
    %v741 = vunpack.c.l.b16 %v708
    %v742 = vunpack.c.l.b16 %v709
    %v743 = vunpack.c.l.b16 %v710
    %v744 = vunpack.c.l.b16 %v711
    %v745 = vunpack.c.l.b16 %v712
    %v746 = vunpack.c.l.b16 %v713
    %v747 = vunpack.c.l.b16 %v714
    %v748 = vunpack.c.l.b16 %v715
    %v749 = vpack.c.b16 %v734, %v733
    %v750 = vpack.c.b16 %v736, %v735
    %v751 = vpack.c.b16 %v738, %v737
    %v752 = vpack.c.b16 %v740, %v739
    %v753 = vpack.c.b16 %v742, %v741
    %v754 = vpack.c.b16 %v744, %v743
    %v755 = vpack.c.b16 %v746, %v745
    %v756 = vpack.c.b16 %v748, %v747
    %765 = vmatprep.subr.bf16.mxu0 0
    %766 = vmatpush1.bf16.msra.mxu0 %v749
    %767 = vmatprep.subr.bf16.mxu0 0
    %768 = vmatpush1.bf16.msra.mxu0 %v750
    %769 = vmatprep.subr.bf16.mxu0 0
    %770 = vmatpush1.bf16.msra.mxu0 %v751
    %771 = vmatprep.subr.bf16.mxu0 0
    %772 = vmatpush1.bf16.msra.mxu0 %v752
    %773 = vmatprep.subr.bf16.mxu0 0
    %774 = vmatpush1.bf16.msra.mxu0 %v753
    %775 = vmatprep.subr.bf16.mxu0 0
    %776 = vmatpush1.bf16.msra.mxu0 %v754
    %777 = vmatprep.subr.bf16.mxu0 0
    %778 = vmatpush1.bf16.msra.mxu0 %v755
    %779 = vmatprep.subr.bf16.mxu0 0
    %780 = vmatpush1.bf16.msra.mxu0 %v756
    %781 = vmatprep.subr.bf16.mxu0 0
    %782 = vmatpush1.bf16.msra.mxu0 0
    %783 = vmatprep.subr.bf16.mxu0 0
    %784 = vmatpush1.bf16.msra.mxu0 0
    %785 = vmatprep.subr.bf16.mxu0 0
    %786 = vmatpush1.bf16.msra.mxu0 0
    %787 = vmatprep.subr.bf16.mxu0 0
    %788 = vmatpush1.bf16.msra.mxu0 0
    %789 = vmatprep.subr.bf16.mxu0 0
    %790 = vmatpush1.bf16.msra.mxu0 0
    %791 = vmatprep.subr.bf16.mxu0 0
    %792 = vmatpush1.bf16.msra.mxu0 0
    %793 = vmatprep.subr.bf16.mxu0 0
    %794 = vmatpush1.bf16.msra.mxu0 0
    %795 = vmatprep.subr.bf16.mxu0 0
    %796 = vmatpush1.bf16.msra.mxu0 0
    %797 = vmatprep.mubr.bf16.mxu0 0
    %798 = vmatmul.mubr.bf16.gmra.mrb[0].mxu0 %v716
    %v799 = vpop.f32.mrb[0].mxu0
    %v800 = vadd.f32 0.0, %v799
    %v801 = vpop.f32.mrb[0].mxu0
    %v802 = vpop.f32.mrb[0].mxu0
    %v803 = vpop.f32.mrb[0].mxu0
    %804 = vdwg.mxu0
    %v805 = vld [vmem:[%s2 + $0x40] sm:$0xf]
    %v806 = vunpack.c.l.bf16 %v805
    %v807 = vmul.f32 %v800, %v806
    %v808 = vld [vmem:[%s2 + $0x48] sm:$0xf]
    %v809 = vld [vmem:[%s2 + $0x4c] sm:$0xf]
    %v810 = vld [vmem:[%s2 + $0x50] sm:$0xf]
    %v811 = vld [vmem:[%s2 + $0x54] sm:$0xf]
    %v812 = vld [vmem:[%s2 + $0x58] sm:$0xf]
    %v813 = vld [vmem:[%s2 + $0x5c] sm:$0xf]
    %v814 = vld [vmem:[%s2 + $0x60] sm:$0xf]
    %v815 = vld [vmem:[%s2 + $0x64] sm:$0xf]
    %v816 = vld [vmem:[%s2 + $0x68] sm:$0xf]
    %v817 = vld [vmem:[%s2 + $0x6c] sm:$0xf]
    %v818 = vld [vmem:[%s2 + $0x70] sm:$0xf]
    %v819 = vld [vmem:[%s2 + $0x74] sm:$0xf]
    %v820 = vld [vmem:[%s2 + $0x78] sm:$0xf]
    %v821 = vld [vmem:[%s2 + $0x7c] sm:$0xf]
    %v822 = vld [vmem:[%s2 + $0x80] sm:$0xf]
    %v823 = vld [vmem:[%s2 + $0x84] sm:$0xf]
    %v824 = vpack.c.bf16 %v807, %v807
    %v841 = vunpack.c.l.b16 %v808
    %v842 = vunpack.c.l.b16 %v809
    %v843 = vunpack.c.l.b16 %v810
    %v844 = vunpack.c.l.b16 %v811
    %v845 = vunpack.c.l.b16 %v812
    %v846 = vunpack.c.l.b16 %v813
    %v847 = vunpack.c.l.b16 %v814
    %v848 = vunpack.c.l.b16 %v815
    %v849 = vunpack.c.l.b16 %v816
    %v850 = vunpack.c.l.b16 %v817
    %v851 = vunpack.c.l.b16 %v818
    %v852 = vunpack.c.l.b16 %v819
    %v853 = vunpack.c.l.b16 %v820
    %v854 = vunpack.c.l.b16 %v821
    %v855 = vunpack.c.l.b16 %v822
    %v856 = vunpack.c.l.b16 %v823
    %v857 = vpack.c.b16 %v842, %v841
    %v858 = vpack.c.b16 %v844, %v843
    %v859 = vpack.c.b16 %v846, %v845
    %v860 = vpack.c.b16 %v848, %v847
    %v861 = vpack.c.b16 %v850, %v849
    %v862 = vpack.c.b16 %v852, %v851
    %v863 = vpack.c.b16 %v854, %v853
    %v864 = vpack.c.b16 %v856, %v855
    %873 = vmatprep.subr.bf16.mxu0 0
    %874 = vmatpush1.bf16.msra.mxu0 %v857
    %875 = vmatprep.subr.bf16.mxu0 0
    %876 = vmatpush1.bf16.msra.mxu0 %v858
    %877 = vmatprep.subr.bf16.mxu0 0
    %878 = vmatpush1.bf16.msra.mxu0 %v859
    %879 = vmatprep.subr.bf16.mxu0 0
    %880 = vmatpush1.bf16.msra.mxu0 %v860
    %881 = vmatprep.subr.bf16.mxu0 0
    %882 = vmatpush1.bf16.msra.mxu0 %v861
    %883 = vmatprep.subr.bf16.mxu0 0
    %884 = vmatpush1.bf16.msra.mxu0 %v862
    %885 = vmatprep.subr.bf16.mxu0 0
    %886 = vmatpush1.bf16.msra.mxu0 %v863
    %887 = vmatprep.subr.bf16.mxu0 0
    %888 = vmatpush1.bf16.msra.mxu0 %v864
    %889 = vmatprep.subr.bf16.mxu0 0
    %890 = vmatpush1.bf16.msra.mxu0 0
    %891 = vmatprep.subr.bf16.mxu0 0
    %892 = vmatpush1.bf16.msra.mxu0 0
    %893 = vmatprep.subr.bf16.mxu0 0
    %894 = vmatpush1.bf16.msra.mxu0 0
    %895 = vmatprep.subr.bf16.mxu0 0
    %896 = vmatpush1.bf16.msra.mxu0 0
    %897 = vmatprep.subr.bf16.mxu0 0
    %898 = vmatpush1.bf16.msra.mxu0 0
    %899 = vmatprep.subr.bf16.mxu0 0
    %900 = vmatpush1.bf16.msra.mxu0 0
    %901 = vmatprep.subr.bf16.mxu0 0
    %902 = vmatpush1.bf16.msra.mxu0 0
    %903 = vmatprep.subr.bf16.mxu0 0
    %904 = vmatpush1.bf16.msra.mxu0 0
    %905 = vmatprep.mubr.bf16.mxu0 0
    %906 = vmatmul.mubr.bf16.gmra.mrb[0].mxu0 %v824
    %v907 = vpop.f32.mrb[0].mxu0
    %v908 = vadd.f32 0.0, %v907
    %v909 = vpop.f32.mrb[0].mxu0
    %v910 = vpop.f32.mrb[0].mxu0
    %v911 = vpop.f32.mrb[0].mxu0
    %912 = vdwg.mxu0
    %v913 = vld [vmem:[%s2 + $0x88] sm:$0x1]
    %v914 = vpack.c.bf16 %v908, %v908
    %v915 = vld [vmem:[%s2 + $0xe0] sm:$0x1]
    %v916 = vunpack.c.l.bf16 %v915
    %v917 = vlaneseq
    %v918 = vshrl.u32 %v917, 7
    %v919 = vsub.s32 0, %v918
    %v920 = vrot.slane %v916, %v919
    %vm921 = vcmask 64512
    %v923 = vsel %vm921, %v913, 0
    %vm925 = vcmask 1043456
    %v927 = vsel %vm925, %v914, 0
    %929 = vmatprep.subr.bf16.mxu0 0
    %930 = vmatpush1.bf16.msra.mxu0 %v927
    %931 = vmatprep.subr.bf16.mxu0 0
    %932 = vmatpush1.bf16.msra.mxu0 0
    %933 = vmatprep.subr.bf16.mxu0 0
    %934 = vmatpush1.bf16.msra.mxu0 0
    %935 = vmatprep.subr.bf16.mxu0 0
    %936 = vmatpush1.bf16.msra.mxu0 0
    %937 = vmatprep.subr.bf16.mxu0 0
    %938 = vmatpush1.bf16.msra.mxu0 0
    %939 = vmatprep.subr.bf16.mxu0 0
    %940 = vmatpush1.bf16.msra.mxu0 0
    %941 = vmatprep.subr.bf16.mxu0 0
    %942 = vmatpush1.bf16.msra.mxu0 0
    %943 = vmatprep.subr.bf16.mxu0 0
    %944 = vmatpush1.bf16.msra.mxu0 0
    %945 = vmatprep.subr.bf16.mxu0 0
    %946 = vmatpush1.bf16.msra.mxu0 0
    %947 = vmatprep.subr.bf16.mxu0 0
    %948 = vmatpush1.bf16.msra.mxu0 0
    %949 = vmatprep.subr.bf16.mxu0 0
    %950 = vmatpush1.bf16.msra.mxu0 0
    %951 = vmatprep.subr.bf16.mxu0 0
    %952 = vmatpush1.bf16.msra.mxu0 0
    %953 = vmatprep.subr.bf16.mxu0 0
    %954 = vmatpush1.bf16.msra.mxu0 0
    %955 = vmatprep.subr.bf16.mxu0 0
    %956 = vmatpush1.bf16.msra.mxu0 0
    %957 = vmatprep.subr.bf16.mxu0 0
    %958 = vmatpush1.bf16.msra.mxu0 0
    %959 = vmatprep.subr.bf16.mxu0 0
    %960 = vmatpush1.bf16.msra.mxu0 0
    %961 = vmatprep.mubr.bf16.mxu0 0
    %962 = vmatmul.mubr.bf16.gmra.mrb[0].mxu0 %v923
    %v963 = vpop.f32.mrb[0].mxu0
    %v964 = vadd.f32 %v920, %v963
    %v965 = vpop.f32.mrb[0].mxu0
    %v966 = vpop.f32.mrb[0].mxu0
    %v967 = vpop.f32.mrb[0].mxu0
    %968 = vdwg.mxu0
    %v969 = vmax.f32 %v964, 0.0
    %v970 = vld [vmem:[%s2 + $0xe8] sm:$0xf]
    %v971 = vld [vmem:[%s2 + $0xec] sm:$0xf]
    %v972 = vld [vmem:[%s2 + $0xf0] sm:$0xf]
    %v973 = vld [vmem:[%s2 + $0xf4] sm:$0xf]
    %v974 = vpack.c.bf16 %v969, %v969
    %v975 = vld [vmem:[%s2 + $0xf8] sm:$0x1]
    %v976 = vunpack.c.l.bf16 %v975
    %v977 = vlaneseq
    %v978 = vshrl.u32 %v977, 7
    %v979 = vsub.s32 0, %v978
    %v980 = vrot.slane %v976, %v979
    %v985 = vunpack.c.l.b16 %v970
    %v986 = vunpack.c.l.b16 %v971
    %v987 = vunpack.c.l.b16 %v972
    %v988 = vunpack.c.l.b16 %v973
    %v989 = vpack.c.b16 %v986, %v985
    %v990 = vpack.c.b16 %v988, %v987
    %v994 = vsel %vm318, %v974, 0
    %996 = vmatprep.subr.bf16.mxu0 0
    %997 = vmatpush1.bf16.msra.mxu0 %v989
    %998 = vmatprep.subr.bf16.mxu0 0
    %999 = vmatpush1.bf16.msra.mxu0 %v990
    %1000 = vmatprep.subr.bf16.mxu0 0
    %1001 = vmatpush1.bf16.msra.mxu0 0
    %1002 = vmatprep.subr.bf16.mxu0 0
    %1003 = vmatpush1.bf16.msra.mxu0 0
    %1004 = vmatprep.subr.bf16.mxu0 0
    %1005 = vmatpush1.bf16.msra.mxu0 0
    %1006 = vmatprep.subr.bf16.mxu0 0
    %1007 = vmatpush1.bf16.msra.mxu0 0
    %1008 = vmatprep.subr.bf16.mxu0 0
    %1009 = vmatpush1.bf16.msra.mxu0 0
    %1010 = vmatprep.subr.bf16.mxu0 0
    %1011 = vmatpush1.bf16.msra.mxu0 0
    %1012 = vmatprep.subr.bf16.mxu0 0
    %1013 = vmatpush1.bf16.msra.mxu0 0
    %1014 = vmatprep.subr.bf16.mxu0 0
    %1015 = vmatpush1.bf16.msra.mxu0 0
    %1016 = vmatprep.subr.bf16.mxu0 0
    %1017 = vmatpush1.bf16.msra.mxu0 0
    %1018 = vmatprep.subr.bf16.mxu0 0
    %1019 = vmatpush1.bf16.msra.mxu0 0
    %1020 = vmatprep.subr.bf16.mxu0 0
    %1021 = vmatpush1.bf16.msra.mxu0 0
    %1022 = vmatprep.subr.bf16.mxu0 0
    %1023 = vmatpush1.bf16.msra.mxu0 0
    %1024 = vmatprep.subr.bf16.mxu0 0
    %1025 = vmatpush1.bf16.msra.mxu0 0
    %1026 = vmatprep.subr.bf16.mxu0 0
    %1027 = vmatpush1.bf16.msra.mxu0 0
    %1028 = vmatprep.mubr.bf16.mxu0 0
    %1029 = vmatmul.mubr.bf16.gmra.mrb[0].mxu0 %v994
    %v1030 = vpop.f32.mrb[0].mxu0
    %v1031 = vadd.f32 %v980, %v1030
    %v1032 = vpop.f32.mrb[0].mxu0
    %v1033 = vpop.f32.mrb[0].mxu0
    %v1034 = vpop.f32.mrb[0].mxu0
    %1035 = vdwg.mxu0
    %vm1036 = vcmask 17408
    %1037 = vst.msk [vmem:[#allocation2] sm:$0x3] %vm1036, %v1031
    // Predicated region
    $region14: #{forward.1} parent=1 // pred_check
      _
    $region15: #{forward.1} parent=1 // pred_check_branch
      %1039 = sbr.rel (0) target = $region17
    $region16: #{forward.1} parent=1 // pred_region
      %s1041 = ssub.s32 32, 32
      %1042 = vsyncadd [#allocation3], %s1041
      %s1044 = sshll.u32 [#allocation2], 4
      %s1045 = int_to_ptr.vmem [resolvable:$true] %s1044
      %1047 = dma.vmem_to_hbm [thread:$0]  %s1045, 32, %s3, [#allocation3]
    $region17: #{forward.1} parent=1 // pred_fallthru
      _
    // Predicated region
    $region18: #{forward.1} parent=1 // pred_check
      _
    $region19: #{forward.1} parent=1 // pred_check_branch
      %1049 = sbr.rel (0) target = $region21
    $region20: #{forward.1} parent=1 // pred_region
      %1050 = dma.done [#allocation3], 32
    $region21: #{forward.1} parent=1 // pred_fallthru
      _
    %1051 = vsyncpa [#allocation3], 1

</llo_original>
